<compile_context>
chip_gen: v7x
topology: tpu7x:2x2x1
jax: 0.10.0
libtpu: 0.0.40
codegen_flags: <defaults>
</compile_context>

<pallas_src>
import functools
import math

import jax
import jax.numpy as jnp
from jax.experimental import pallas as pl
from jax.experimental.pallas import tpu as pltpu
from jax.scipy.special import gammaln, xlogy

# ---- module "parameters" (deterministic, from __init__ defaults) -------------
BETA = 1.0          # unused in forward
EPS = 1e-8          # unused in forward (only used by .constraint())
PRIOR_BERN = 0.2
PRIOR_MEAN = 2.0
PRIOR_STD = 1.0
_HALF_LOG_2PI = 0.5 * math.log(2.0 * math.pi)
_LOG_PB = math.log(PRIOR_BERN)
_LOG_1M_PB = math.log(1.0 - PRIOR_BERN)
_LOG_CHUNK = 4      # samples multiplied per EUP log; keep <= 4 to stay inside f32 range


def _lgamma_plus1(c):
    """lgamma(c + 1) for non-negative integer-valued counts, computed in-kernel.

    Exact 0 for c in {0, 1}; Stirling series through the 1/x^5 term for c >= 2
    (abs error < 3e-7 at c == 2, smaller above).  Avoids a third HBM traversal of
    the big arrays (XLA read counts -> write lgc -> kernel read lgc)."""
    x = jnp.maximum(c + 1.0, 3.0)
    inv = 1.0 / x
    inv2 = inv * inv
    stirling = ((x - 0.5) * jnp.log(x) - x + _HALF_LOG_2PI
                + inv * (1.0 / 12.0 - inv2 * (1.0 / 360.0 - inv2 * (1.0 / 1260.0))))
    return jnp.where(c < 2.0, 0.0, stirling)


# ------------------------------ kernel -----------------------------------------
def _ll_kernel(z_ref, p_ref, bg_ref, c_ref, ll_ref, klb_ref, *, num_samples):
    """1-D grid over row tiles; the whole S loop runs inside one grid step.

    z_ref   : [TR, S]    z sample values per row (tiny; one DMA per tile)
    p_ref   : [TR, 128]  profile
    bg_ref  : [TR, 128]  background
    c_ref   : [TR, 128]  counts
    ll_ref  : [TR, 128]  output: mean_s Poisson log-prob
    klb_ref : [1, 128]   output: per-tile partial column-sums of the Bernoulli KL
    """
    p = p_ref[...]
    bg = bg_ref[...]
    c = c_ref[...]
    zv = z_ref[...]                                   # [TR, S]

    # sum_s log(rate_s) with S logs folded to S/_LOG_CHUNK logs via chunked products:
    # the multiplies go to the slack 4-wide VPU, the logs to the single EUP.
    sum_logs = None
    z_sum = None
    for s0 in range(0, num_samples, _LOG_CHUNK):      # statically unrolled (S is static)
        prod = None
        for s in range(s0, min(s0 + _LOG_CHUNK, num_samples)):
            z_s = zv[:, s:s + 1]                      # [TR, 1] -> lane-broadcast in the mul
            z_sum = z_s if z_sum is None else z_sum + z_s
            rate = z_s * p + bg
            prod = rate if prod is None else prod * rate
        chunk_log = jnp.log(prod)
        sum_logs = chunk_log if sum_logs is None else sum_logs + chunk_log

    inv_s = 1.0 / num_samples
    # mean_s xlogy(c, rate_s) = c * mean_s log(rate_s), gated at c == 0 (xlogy semantics;
    # exact compare is correct for integer-valued counts).
    xlogy_mean = jnp.where(c == 0.0, 0.0, c * (sum_logs * inv_s))
    mean_rate = p * (z_sum * inv_s) + bg              # hoisted: mean_s(rate_s)
    ll_ref[...] = xlogy_mean - mean_rate - _lgamma_plus1(c)

    # KL( Bernoulli(p) || Bernoulli(PRIOR_BERN) ): sample-independent, fused here so p is
    # read from HBM exactly once; only a [1, 128] partial sum is written back.
    # NOTE: matches the reference exactly; p is assumed strictly inside (0, 1).
    t = (p * (jnp.log(p) - _LOG_PB)
         + (1.0 - p) * (jnp.log(1.0 - p) - _LOG_1M_PB))
    klb_ref[...] = jnp.sum(t, axis=0, keepdims=True)


def _pick_tr(R, max_tr=2048):
    """Largest row tile: the whole fold if it fits the VMEM-safe cap, else the largest
    multiple-of-8 divisor of R below the cap.  No forced multi-tile split: on
    single-core v5e/v6e extra grid steps are pure overhead, and on v7x megacore
    sharding only pays once each half carries well over the fixed per-step cost."""
    if R <= max_tr:
        return R
    best = None
    for t in range(8, max_tr + 1, 8):
        if R % t == 0:
            best = t
    return best if best is not None else R


# ------------------------------ wrapper ----------------------------------------
def poisson_likelihood_forward(counts, p, bg, q_loc, q_scale, noise, vi=True, max_tr=2048):
    """Mirrors PoissonLikelihood.forward(counts, p, bg, q, mc_samples, vi).

    q is a LogNormal(q_loc, q_scale); z = q.rsample([S]) is computed via the
    reparameterization trick using `noise` ~ N(0, 1) of shape [S, B]."""
    B, N = counts.shape
    S = noise.shape[0]
    assert N % 128 == 0, "pixel dim must be a multiple of 128 (lane width)"

    counts = counts.astype(jnp.float32)
    rows_per_batch = N // 128
    R = B * rows_per_batch                              # fold B into the sublane axis

    # z = exp(loc + scale * eps)  -> [S, B]
    z = jnp.exp(q_loc.reshape(1, B) + q_scale.reshape(1, B) * noise)
    z_rt = jnp.repeat(z, rows_per_batch, axis=1).T      # [R, S]; row r <-> (b, n // 128)

    # Fold [B, N] -> [R, 128] so every vreg row is full and stores are lane-dense.
    c2 = counts.reshape(R, 128)
    p2 = p[:, :, 0].reshape(R, 128)                     # p.permute(2,0,1): leading 1 is broadcast only
    bg2 = bg.reshape(R, 128)

    TR = _pick_tr(R, max_tr)
    n_tiles = R // TR

    kernel = functools.partial(_ll_kernel, num_samples=S)

    ll2, klb = pl.pallas_call(
        kernel,
        out_shape=(jax.ShapeDtypeStruct((R, 128), jnp.float32),
                   jax.ShapeDtypeStruct((n_tiles, 1, 128), jnp.float32)),
        grid_spec=pltpu.PrefetchScalarGridSpec(
            num_scalar_prefetch=0,
            grid=(n_tiles,),
            in_specs=[
                pl.BlockSpec((TR, S), lambda j: (j, 0)),            # z (tiny, one DMA/tile)
                pl.BlockSpec((TR, 128), lambda j: (j, 0)),          # p
                pl.BlockSpec((TR, 128), lambda j: (j, 0)),          # bg
                pl.BlockSpec((TR, 128), lambda j: (j, 0)),          # counts
            ],
            out_specs=[
                pl.BlockSpec((TR, 128), lambda j: (j, 0)),          # ll
                pl.BlockSpec((None, 1, 128), lambda j: (j, 0, 0)),  # Bernoulli-KL partials
            ],
        ),
        compiler_params=pltpu.CompilerParams(
            dimension_semantics=("parallel",)),
    )(z_rt, p2, bg2, c2)

    ll = ll2.reshape(B, N)

    if vi:
        # Tiny [S, B] LogNormal KL in plain JAX (a second pallas_call's launch/DMA cost
        # dwarfs the math at this size).
        log_z = jnp.log(z)
        ql = q_loc.reshape(1, B)
        qs = q_scale.reshape(1, B)
        q_lp = (-log_z - jnp.log(qs) - _HALF_LOG_2PI
                - (log_z - ql) ** 2 / (2.0 * qs * qs))
        p_lp = (-log_z - math.log(PRIOR_STD) - _HALF_LOG_2PI
                - (log_z - PRIOR_MEAN) ** 2 / (2.0 * PRIOR_STD * PRIOR_STD))
        kl_bern = jnp.sum(klb) / float(B * N)
        kl_term = jnp.mean(q_lp - p_lp) + kl_bern
    else:
        kl_term = jnp.float32(0.0)
    return ll, kl_term


# ------------------------------ pure-JAX reference ------------------------------
def reference_forward(counts, p, bg, q_loc, q_scale, noise, vi=True):
    counts = counts.astype(jnp.float32)
    z = jnp.exp(q_loc[None, :, :] + q_scale[None, :, :] * noise[:, :, None])  # [S, B, 1]
    p_perm = jnp.transpose(p, (2, 0, 1))                                      # [1, B, N]
    rate = z * p_perm + bg[None, ...]                                         # [S, B, N]
    ll = xlogy(counts, rate) - rate - gammaln(counts + 1.0)
    ll = ll.mean(0)
    if vi:
        log_z = jnp.log(z)
        q_lp = (-log_z - jnp.log(q_scale)[None] - _HALF_LOG_2PI
                - (log_z - q_loc[None]) ** 2 / (2.0 * q_scale[None] ** 2))
        p_lp = (-log_z - math.log(PRIOR_STD) - _HALF_LOG_2PI
                - (log_z - PRIOR_MEAN) ** 2 / (2.0 * PRIOR_STD ** 2))
        kl_bern = jnp.mean(p_perm * (jnp.log(p_perm) - math.log(PRIOR_BERN))
                           + (1.0 - p_perm) * (jnp.log(1.0 - p_perm) - math.log(1.0 - PRIOR_BERN)))
        kl_term = jnp.mean(q_lp - p_lp) + kl_bern
    else:
        kl_term = jnp.float32(0.0)
    return ll, kl_term


# ------------------------------ main --------------------------------------------
if __name__ == "__main__":
    B, N, S = 4, 512, 16   # batch of shoeboxes, pixels per shoebox, MC samples
    key = jax.random.PRNGKey(0)
    k1, k2, k3, k4, k5, k6 = jax.random.split(key, 6)

    # profile p in (0, 1) (per-pixel detection probability / profile value)
    p = jax.nn.sigmoid(jax.random.normal(k1, (B, N, 1), jnp.float32) * 0.5 - 1.0)
    bg = jax.nn.softplus(jax.random.normal(k2, (B, N), jnp.float32)) + 0.1
    # counts ~ Poisson-ish nonnegative integers
    counts = jax.random.poisson(k3, 3.0, (B, N)).astype(jnp.float32)
    # variational LogNormal q over intensity, one per shoebox
    q_loc = jax.random.normal(k4, (B, 1), jnp.float32) * 0.3 + 1.0
    q_scale = jax.nn.softplus(jax.random.normal(k5, (B, 1), jnp.float32)) * 0.2 + 0.05
    noise = jax.random.normal(k6, (S, B), jnp.float32)

    ll, kl = poisson_likelihood_forward(counts, p, bg, q_loc, q_scale, noise, vi=True)
    jax.block_until_ready((ll, kl))

    ll_ref, kl_ref = reference_forward(counts, p, bg, q_loc, q_scale, noise, vi=True)
    assert ll.shape == (B, N)
    assert jnp.allclose(ll, ll_ref, rtol=1e-3, atol=1e-3), "ll mismatch vs reference"
    assert jnp.allclose(kl, kl_ref, rtol=1e-3, atol=1e-3), "kl mismatch vs reference"

    print("KERNEL_OK")
</pallas_src>

<mosaic_0001>
module attributes {stable_mosaic.version = 11 : i64} {
  func.func @_ll_kernel(%arg0: i32, %arg1: memref<16x16xf32, #tpu.memory_space<vmem>>, %arg2: memref<16x128xf32, #tpu.memory_space<vmem>>, %arg3: memref<16x128xf32, #tpu.memory_space<vmem>>, %arg4: memref<16x128xf32, #tpu.memory_space<vmem>>, %arg5: memref<16x128xf32, #tpu.memory_space<vmem>>, %arg6: memref<1x1x128xf32, #tpu.memory_space<vmem>>) attributes {dimension_semantics = [#tpu.dimension_semantics<parallel>], iteration_bounds = array<i64: 1>, scalar_prefetch = 0 : i64, scratch_operands = 0 : i64, tpu.core_type = #tpu.core_type<tc>, window_params = [{transform_indices = @transform_0, window_bounds = array<i64: 16, 16>}, {transform_indices = @transform_1, window_bounds = array<i64: 16, 128>}, {transform_indices = @transform_2, window_bounds = array<i64: 16, 128>}, {transform_indices = @transform_3, window_bounds = array<i64: 16, 128>}, {transform_indices = @transform_4, window_bounds = array<i64: 16, 128>}, {transform_indices = @transform_5, window_bounds = array<i64: 1, 1, 128>}]} {
    %c0 = arith.constant 0 : index
    %c0_0 = arith.constant 0 : index
    %0 = vector.load %arg2[%c0, %c0_0] : memref<16x128xf32, #tpu.memory_space<vmem>>, vector<16x128xf32>
    %c0_1 = arith.constant 0 : index
    %c0_2 = arith.constant 0 : index
    %1 = vector.load %arg3[%c0_1, %c0_2] : memref<16x128xf32, #tpu.memory_space<vmem>>, vector<16x128xf32>
    %c0_3 = arith.constant 0 : index
    %c0_4 = arith.constant 0 : index
    %2 = vector.load %arg4[%c0_3, %c0_4] : memref<16x128xf32, #tpu.memory_space<vmem>>, vector<16x128xf32>
    %c0_5 = arith.constant 0 : index
    %c0_6 = arith.constant 0 : index
    %3 = vector.load %arg1[%c0_5, %c0_6] : memref<16x16xf32, #tpu.memory_space<vmem>>, vector<16x16xf32>
    %4 = vector.extract_strided_slice %3 {offsets = [0, 0], sizes = [16, 1], strides = [1, 1]} : vector<16x16xf32> to vector<16x1xf32>
    %5 = vector.broadcast %4 : vector<16x1xf32> to vector<16x128xf32>
    %6 = arith.mulf %5, %0 : vector<16x128xf32>
    %7 = arith.addf %6, %1 : vector<16x128xf32>
    %8 = vector.extract_strided_slice %3 {offsets = [0, 1], sizes = [16, 1], strides = [1, 1]} : vector<16x16xf32> to vector<16x1xf32>
    %9 = arith.addf %4, %8 : vector<16x1xf32>
    %10 = vector.broadcast %8 : vector<16x1xf32> to vector<16x128xf32>
    %11 = arith.mulf %10, %0 : vector<16x128xf32>
    %12 = arith.addf %11, %1 : vector<16x128xf32>
    %13 = arith.mulf %7, %12 : vector<16x128xf32>
    %14 = vector.extract_strided_slice %3 {offsets = [0, 2], sizes = [16, 1], strides = [1, 1]} : vector<16x16xf32> to vector<16x1xf32>
    %15 = arith.addf %9, %14 : vector<16x1xf32>
    %16 = vector.broadcast %14 : vector<16x1xf32> to vector<16x128xf32>
    %17 = arith.mulf %16, %0 : vector<16x128xf32>
    %18 = arith.addf %17, %1 : vector<16x128xf32>
    %19 = arith.mulf %13, %18 : vector<16x128xf32>
    %20 = vector.extract_strided_slice %3 {offsets = [0, 3], sizes = [16, 1], strides = [1, 1]} : vector<16x16xf32> to vector<16x1xf32>
    %21 = arith.addf %15, %20 : vector<16x1xf32>
    %22 = vector.broadcast %20 : vector<16x1xf32> to vector<16x128xf32>
    %23 = arith.mulf %22, %0 : vector<16x128xf32>
    %24 = arith.addf %23, %1 : vector<16x128xf32>
    %25 = arith.mulf %19, %24 : vector<16x128xf32>
    %26 = math.log %25 : vector<16x128xf32>
    %27 = vector.extract_strided_slice %3 {offsets = [0, 4], sizes = [16, 1], strides = [1, 1]} : vector<16x16xf32> to vector<16x1xf32>
    %28 = arith.addf %21, %27 : vector<16x1xf32>
    %29 = vector.broadcast %27 : vector<16x1xf32> to vector<16x128xf32>
    %30 = arith.mulf %29, %0 : vector<16x128xf32>
    %31 = arith.addf %30, %1 : vector<16x128xf32>
    %32 = vector.extract_strided_slice %3 {offsets = [0, 5], sizes = [16, 1], strides = [1, 1]} : vector<16x16xf32> to vector<16x1xf32>
    %33 = arith.addf %28, %32 : vector<16x1xf32>
    %34 = vector.broadcast %32 : vector<16x1xf32> to vector<16x128xf32>
    %35 = arith.mulf %34, %0 : vector<16x128xf32>
    %36 = arith.addf %35, %1 : vector<16x128xf32>
    %37 = arith.mulf %31, %36 : vector<16x128xf32>
    %38 = vector.extract_strided_slice %3 {offsets = [0, 6], sizes = [16, 1], strides = [1, 1]} : vector<16x16xf32> to vector<16x1xf32>
    %39 = arith.addf %33, %38 : vector<16x1xf32>
    %40 = vector.broadcast %38 : vector<16x1xf32> to vector<16x128xf32>
    %41 = arith.mulf %40, %0 : vector<16x128xf32>
    %42 = arith.addf %41, %1 : vector<16x128xf32>
    %43 = arith.mulf %37, %42 : vector<16x128xf32>
    %44 = vector.extract_strided_slice %3 {offsets = [0, 7], sizes = [16, 1], strides = [1, 1]} : vector<16x16xf32> to vector<16x1xf32>
    %45 = arith.addf %39, %44 : vector<16x1xf32>
    %46 = vector.broadcast %44 : vector<16x1xf32> to vector<16x128xf32>
    %47 = arith.mulf %46, %0 : vector<16x128xf32>
    %48 = arith.addf %47, %1 : vector<16x128xf32>
    %49 = arith.mulf %43, %48 : vector<16x128xf32>
    %50 = math.log %49 : vector<16x128xf32>
    %51 = arith.addf %26, %50 : vector<16x128xf32>
    %52 = vector.extract_strided_slice %3 {offsets = [0, 8], sizes = [16, 1], strides = [1, 1]} : vector<16x16xf32> to vector<16x1xf32>
    %53 = arith.addf %45, %52 : vector<16x1xf32>
    %54 = vector.broadcast %52 : vector<16x1xf32> to vector<16x128xf32>
    %55 = arith.mulf %54, %0 : vector<16x128xf32>
    %56 = arith.addf %55, %1 : vector<16x128xf32>
    %57 = vector.extract_strided_slice %3 {offsets = [0, 9], sizes = [16, 1], strides = [1, 1]} : vector<16x16xf32> to vector<16x1xf32>
    %58 = arith.addf %53, %57 : vector<16x1xf32>
    %59 = vector.broadcast %57 : vector<16x1xf32> to vector<16x128xf32>
    %60 = arith.mulf %59, %0 : vector<16x128xf32>
    %61 = arith.addf %60, %1 : vector<16x128xf32>
    %62 = arith.mulf %56, %61 : vector<16x128xf32>
    %63 = vector.extract_strided_slice %3 {offsets = [0, 10], sizes = [16, 1], strides = [1, 1]} : vector<16x16xf32> to vector<16x1xf32>
    %64 = arith.addf %58, %63 : vector<16x1xf32>
    %65 = vector.broadcast %63 : vector<16x1xf32> to vector<16x128xf32>
    %66 = arith.mulf %65, %0 : vector<16x128xf32>
    %67 = arith.addf %66, %1 : vector<16x128xf32>
    %68 = arith.mulf %62, %67 : vector<16x128xf32>
    %69 = vector.extract_strided_slice %3 {offsets = [0, 11], sizes = [16, 1], strides = [1, 1]} : vector<16x16xf32> to vector<16x1xf32>
    %70 = arith.addf %64, %69 : vector<16x1xf32>
    %71 = vector.broadcast %69 : vector<16x1xf32> to vector<16x128xf32>
    %72 = arith.mulf %71, %0 : vector<16x128xf32>
    %73 = arith.addf %72, %1 : vector<16x128xf32>
    %74 = arith.mulf %68, %73 : vector<16x128xf32>
    %75 = math.log %74 : vector<16x128xf32>
    %76 = arith.addf %51, %75 : vector<16x128xf32>
    %77 = vector.extract_strided_slice %3 {offsets = [0, 12], sizes = [16, 1], strides = [1, 1]} : vector<16x16xf32> to vector<16x1xf32>
    %78 = arith.addf %70, %77 : vector<16x1xf32>
    %79 = vector.broadcast %77 : vector<16x1xf32> to vector<16x128xf32>
    %80 = arith.mulf %79, %0 : vector<16x128xf32>
    %81 = arith.addf %80, %1 : vector<16x128xf32>
    %82 = vector.extract_strided_slice %3 {offsets = [0, 13], sizes = [16, 1], strides = [1, 1]} : vector<16x16xf32> to vector<16x1xf32>
    %83 = arith.addf %78, %82 : vector<16x1xf32>
    %84 = vector.broadcast %82 : vector<16x1xf32> to vector<16x128xf32>
    %85 = arith.mulf %84, %0 : vector<16x128xf32>
    %86 = arith.addf %85, %1 : vector<16x128xf32>
    %87 = arith.mulf %81, %86 : vector<16x128xf32>
    %88 = vector.extract_strided_slice %3 {offsets = [0, 14], sizes = [16, 1], strides = [1, 1]} : vector<16x16xf32> to vector<16x1xf32>
    %89 = arith.addf %83, %88 : vector<16x1xf32>
    %90 = vector.broadcast %88 : vector<16x1xf32> to vector<16x128xf32>
    %91 = arith.mulf %90, %0 : vector<16x128xf32>
    %92 = arith.addf %91, %1 : vector<16x128xf32>
    %93 = arith.mulf %87, %92 : vector<16x128xf32>
    %94 = vector.extract_strided_slice %3 {offsets = [0, 15], sizes = [16, 1], strides = [1, 1]} : vector<16x16xf32> to vector<16x1xf32>
    %95 = arith.addf %89, %94 : vector<16x1xf32>
    %96 = vector.broadcast %94 : vector<16x1xf32> to vector<16x128xf32>
    %97 = arith.mulf %96, %0 : vector<16x128xf32>
    %98 = arith.addf %97, %1 : vector<16x128xf32>
    %99 = arith.mulf %93, %98 : vector<16x128xf32>
    %100 = math.log %99 : vector<16x128xf32>
    %101 = arith.addf %76, %100 : vector<16x128xf32>
    %cst = arith.constant 0.000000e+00 : f32
    %102 = vector.broadcast %cst : f32 to vector<16x128xf32>
    %103 = arith.cmpf oeq, %2, %102 : vector<16x128xf32>
    %cst_7 = arith.constant 6.250000e-02 : f32
    %104 = vector.broadcast %cst_7 : f32 to vector<16x128xf32>
    %105 = arith.mulf %101, %104 : vector<16x128xf32>
    %106 = arith.mulf %2, %105 : vector<16x128xf32>
    %cst_8 = arith.constant 0.000000e+00 : f32
    %107 = vector.broadcast %cst_8 : f32 to vector<16x128xf32>
    %108 = arith.select %103, %107, %106 : vector<16x128xi1>, vector<16x128xf32>
    %cst_9 = arith.constant 6.250000e-02 : f32
    %109 = vector.broadcast %cst_9 : f32 to vector<16x1xf32>
    %110 = arith.mulf %95, %109 : vector<16x1xf32>
    %111 = vector.broadcast %110 : vector<16x1xf32> to vector<16x128xf32>
    %112 = arith.mulf %0, %111 : vector<16x128xf32>
    %113 = arith.addf %112, %1 : vector<16x128xf32>
    %114 = arith.subf %108, %113 : vector<16x128xf32>
    %cst_10 = arith.constant 1.000000e+00 : f32
    %115 = vector.broadcast %cst_10 : f32 to vector<16x128xf32>
    %116 = arith.addf %2, %115 : vector<16x128xf32>
    %cst_11 = arith.constant 3.000000e+00 : f32
    %117 = vector.broadcast %cst_11 : f32 to vector<16x128xf32>
    %118 = arith.maximumf %116, %117 : vector<16x128xf32>
    %cst_12 = arith.constant 1.000000e+00 : f32
    %119 = vector.broadcast %cst_12 : f32 to vector<16x128xf32>
    %120 = arith.divf %119, %118 : vector<16x128xf32>
    %121 = arith.mulf %120, %120 : vector<16x128xf32>
    %cst_13 = arith.constant 5.000000e-01 : f32
    %122 = vector.broadcast %cst_13 : f32 to vector<16x128xf32>
    %123 = arith.subf %118, %122 : vector<16x128xf32>
    %124 = math.log %118 : vector<16x128xf32>
    %125 = arith.mulf %123, %124 : vector<16x128xf32>
    %126 = arith.subf %125, %118 : vector<16x128xf32>
    %cst_14 = arith.constant 0.918938517 : f32
    %127 = vector.broadcast %cst_14 : f32 to vector<16x128xf32>
    %128 = arith.addf %126, %127 : vector<16x128xf32>
    %cst_15 = arith.constant 7.93650805E-4 : f32
    %129 = vector.broadcast %cst_15 : f32 to vector<16x128xf32>
    %130 = arith.mulf %121, %129 : vector<16x128xf32>
    %cst_16 = arith.constant 0.00277777785 : f32
    %131 = vector.broadcast %cst_16 : f32 to vector<16x128xf32>
    %132 = arith.subf %131, %130 : vector<16x128xf32>
    %133 = arith.mulf %121, %132 : vector<16x128xf32>
    %cst_17 = arith.constant 0.0833333358 : f32
    %134 = vector.broadcast %cst_17 : f32 to vector<16x128xf32>
    %135 = arith.subf %134, %133 : vector<16x128xf32>
    %136 = arith.mulf %120, %135 : vector<16x128xf32>
    %137 = arith.addf %128, %136 : vector<16x128xf32>
    %cst_18 = arith.constant 2.000000e+00 : f32
    %138 = vector.broadcast %cst_18 : f32 to vector<16x128xf32>
    %139 = arith.cmpf olt, %2, %138 : vector<16x128xf32>
    %cst_19 = arith.constant 0.000000e+00 : f32
    %140 = vector.broadcast %cst_19 : f32 to vector<16x128xf32>
    %141 = arith.select %139, %140, %137 : vector<16x128xi1>, vector<16x128xf32>
    %142 = arith.subf %114, %141 : vector<16x128xf32>
    %c0_20 = arith.constant 0 : index
    %c0_21 = arith.constant 0 : index
    %143 = vector.load %arg5[%c0_20, %c0_21] : memref<16x128xf32, #tpu.memory_space<vmem>>, vector<16x128xf32>
    tpu.vector_store %arg5[%c0_20, %c0_21], %142 {strides = array<i32>} : memref<16x128xf32, #tpu.memory_space<vmem>>, vector<16x128xf32>,
    %144 = math.log %0 : vector<16x128xf32>
    %cst_22 = arith.constant -1.60943794 : f32
    %145 = vector.broadcast %cst_22 : f32 to vector<16x128xf32>
    %146 = arith.subf %144, %145 : vector<16x128xf32>
    %147 = arith.mulf %0, %146 : vector<16x128xf32>
    %cst_23 = arith.constant 1.000000e+00 : f32
    %148 = vector.broadcast %cst_23 : f32 to vector<16x128xf32>
    %149 = arith.subf %148, %0 : vector<16x128xf32>
    %cst_24 = arith.constant 1.000000e+00 : f32
    %150 = vector.broadcast %cst_24 : f32 to vector<16x128xf32>
    %151 = arith.subf %150, %0 : vector<16x128xf32>
    %152 = math.log %151 : vector<16x128xf32>
    %cst_25 = arith.constant -0.223143548 : f32
    %153 = vector.broadcast %cst_25 : f32 to vector<16x128xf32>
    %154 = arith.subf %152, %153 : vector<16x128xf32>
    %155 = arith.mulf %149, %154 : vector<16x128xf32>
    %156 = arith.addf %147, %155 : vector<16x128xf32>
    %cst_26 = arith.constant dense<0.000000e+00> : vector<128xf32>
    %157 = vector.multi_reduction <add>, %156, %cst_26 [0] : vector<16x128xf32> to vector<128xf32>
    %158 = vector.shape_cast %157 : vector<128xf32> to vector<1x128xf32>
    %c0_27 = arith.constant 0 : index
    %c0_28 = arith.constant 0 : index
    %c0_29 = arith.constant 0 : index
    %159 = vector.load %arg6[%c0_27, %c0_28, %c0_29] : memref<1x1x128xf32, #tpu.memory_space<vmem>>, vector<1x1x128xf32>
    %160 = vector.shape_cast %159 : vector<1x1x128xf32> to vector<1x128xf32>
    %161 = vector.shape_cast %158 : vector<1x128xf32> to vector<1x1x128xf32>
    tpu.vector_store %arg6[%c0_27, %c0_28, %c0_29], %161 {strides = array<i32>} : memref<1x1x128xf32, #tpu.memory_space<vmem>>, vector<1x1x128xf32>,
    return
  }
  func.func @transform_0(%arg0: i32) -> (i32, i32) {
    %c0_i32 = arith.constant 0 : i32
    %c0_i32_0 = arith.constant 0 : i32
    return %arg0, %c0_i32 : i32, i32
  }
  func.func @transform_1(%arg0: i32) -> (i32, i32) {
    %c0_i32 = arith.constant 0 : i32
    %c0_i32_0 = arith.constant 0 : i32
    return %arg0, %c0_i32 : i32, i32
  }
  func.func @transform_2(%arg0: i32) -> (i32, i32) {
    %c0_i32 = arith.constant 0 : i32
    %c0_i32_0 = arith.constant 0 : i32
    return %arg0, %c0_i32 : i32, i32
  }
  func.func @transform_3(%arg0: i32) -> (i32, i32) {
    %c0_i32 = arith.constant 0 : i32
    %c0_i32_0 = arith.constant 0 : i32
    return %arg0, %c0_i32 : i32, i32
  }
  func.func @transform_4(%arg0: i32) -> (i32, i32) {
    %c0_i32 = arith.constant 0 : i32
    %c0_i32_0 = arith.constant 0 : i32
    return %arg0, %c0_i32 : i32, i32
  }
  func.func @transform_5(%arg0: i32) -> (i32, i32, i32) {
    %c0_i32 = arith.constant 0 : i32
    %c0_i32_0 = arith.constant 0 : i32
    %c0_i32_1 = arith.constant 0 : i32
    return %arg0, %c0_i32, %c0_i32_0 : i32, i32, i32
  }
}

</mosaic_0001>

<llo_original>
// kernel: tpu_custom_call.1
$region0: #{tpu_custom_call.1}
  #allocation0 [shape = 'u32[]', space=smem, size = 0x4, offset = 0x4, fixed_abs, tag = 'smem constant byte address 0x4 - core index']
  #allocation1 [shape = 'u32[144,128]{1,0:T(1,128)}', space=vmem, size = 0x12000, scoped, tag = 'internal scratch']
  %s0 = inlined_call_operand.hbm [shape: f32[16,16], index: 0, kind: input, shape index: {}]
  %s1 = inlined_call_operand.hbm [shape: f32[16,128], index: 1, kind: input, shape index: {}]
  %s2 = inlined_call_operand.hbm [shape: f32[16,128], index: 2, kind: input, shape index: {}]
  %s3 = inlined_call_operand.hbm [shape: f32[16,128], index: 3, kind: input, shape index: {}]
  %s4 = inlined_call_operand.hbm [shape: f32[16,128], index: 4, kind: output, shape index: {0}]
  %s5 = inlined_call_operand.hbm [shape: f32[1,1,128], index: 5, kind: output, shape index: {1}]
  %6 = xla_tuple %s4, %s5
  %s7 = sld [smem:[#allocation0]]
  $region50: #{tpu_custom_call.1} parent=0
    _
  %s9 = ssub.s32 1, %s7
  %s10 = scalar_select 0, %s9, %s7
  $region1: #{tpu_custom_call.1} parent=0
    #allocation2 [shape = 'u8[8192]{0}', space=vmem, size = 0x2000, scoped, tag = 'input window, operand 0, single buffered']
    #allocation3 [shape = 's32[1]{0}', space=sflag, size = 0x4, scoped, tag = 'scoped memory for tpu_custom_call.1']
    #allocation4 [shape = 's32[1]{0}', space=sflag, size = 0x4, scoped, tag = 'scoped memory for tpu_custom_call.1']
    #allocation5 [shape = 'u8[8192]{0}', space=vmem, size = 0x2000, scoped, tag = 'input window, operand 1, single buffered']
    #allocation6 [shape = 's32[1]{0}', space=sflag, size = 0x4, scoped, tag = 'scoped memory for tpu_custom_call.1']
    #allocation7 [shape = 'u8[8192]{0}', space=vmem, size = 0x2000, scoped, tag = 'input window, operand 2, single buffered']
    #allocation8 [shape = 'u8[8192]{0}', space=vmem, size = 0x2000, scoped, tag = 'input window, operand 3, single buffered']
    #allocation9 [shape = 's32[1]{0}', space=sflag, size = 0x4, scoped, tag = 'scoped memory for tpu_custom_call.1']
    #allocation10 [shape = 'u8[8192]{0}', space=vmem, size = 0x2000, scoped, tag = 'output window, operand 0, single buffered']
    #allocation11 [shape = 'u8[512]{0}', space=vmem, size = 0x400, scoped, tag = 'output window, operand 1, single buffered']
    #allocation12 [shape = 's32[1]{0}', space=sflag, size = 0x4, scoped, tag = 'scoped memory for tpu_custom_call.1']
    %11 = vsyncpa [#allocation3], 0
    %12 = vsyncpa [#allocation6], 0
    %13 = vsyncpa [#allocation9], 0
    %14 = vsyncpa [#allocation4], 0
    %15 = vsyncpa [#allocation12], 0
    // Predicated region
    $region2: #{tpu_custom_call.1} parent=1 // pred_check
      _
    $region3: #{tpu_custom_call.1} parent=1 // pred_check_branch
      %17 = sbr.rel (0) target = $region5
    $region4: #{tpu_custom_call.1} parent=1 // pred_region
      %s19 = ssub.s32 256, 256
      %20 = vsyncadd [#allocation3], %s19
      %s21 = sshll.u32 [#allocation2], 4
      %s22 = int_to_ptr.vmem [resolvable:$true] %s21
      %27 = dma.hbm_to_vmem [thread:$0]  %s0, 256, %s22, [#allocation3], 128, 128, 8
    $region5: #{tpu_custom_call.1} parent=1 // pred_fallthru
      _
    // Predicated region
    $region6: #{tpu_custom_call.1} parent=1 // pred_check
      _
    $region7: #{tpu_custom_call.1} parent=1 // pred_check_branch
      %29 = sbr.rel (0) target = $region9
    $region8: #{tpu_custom_call.1} parent=1 // pred_region
      %s31 = ssub.s32 256, 256
      %32 = vsyncadd [#allocation6], %s31
      %s33 = sshll.u32 [#allocation5], 4
      %s34 = int_to_ptr.vmem [resolvable:$true] %s33
      %39 = dma.hbm_to_vmem [thread:$0]  %s1, 256, %s34, [#allocation6], 128, 128, 8
    $region9: #{tpu_custom_call.1} parent=1 // pred_fallthru
      _
    // Predicated region
    $region10: #{tpu_custom_call.1} parent=1 // pred_check
      _
    $region11: #{tpu_custom_call.1} parent=1 // pred_check_branch
      %41 = sbr.rel (0) target = $region13
    $region12: #{tpu_custom_call.1} parent=1 // pred_region
      %s43 = ssub.s32 256, 256
      %44 = vsyncadd [#allocation6], %s43
      %s45 = sshll.u32 [#allocation7], 4
      %s46 = int_to_ptr.vmem [resolvable:$true] %s45
      %51 = dma.hbm_to_vmem [thread:$0]  %s2, 256, %s46, [#allocation6], 128, 128, 8
    $region13: #{tpu_custom_call.1} parent=1 // pred_fallthru
      _
    // Predicated region
    $region14: #{tpu_custom_call.1} parent=1 // pred_check
      _
    $region15: #{tpu_custom_call.1} parent=1 // pred_check_branch
      %53 = sbr.rel (0) target = $region17
    $region16: #{tpu_custom_call.1} parent=1 // pred_region
      %s55 = ssub.s32 256, 256
      %56 = vsyncadd [#allocation9], %s55
      %s57 = sshll.u32 [#allocation8], 4
      %s58 = int_to_ptr.vmem [resolvable:$true] %s57
      %63 = dma.hbm_to_vmem [thread:$0]  %s3, 256, %s58, [#allocation9], 128, 128, 8
    $region17: #{tpu_custom_call.1} parent=1 // pred_fallthru
      _
    // Predicated region
    $region18: #{tpu_custom_call.1} parent=1 // pred_check
      _
    $region19: #{tpu_custom_call.1} parent=1 // pred_check_branch
      %65 = sbr.rel (0) target = $region21
    $region20: #{tpu_custom_call.1} parent=1 // pred_region
      %66 = dma.done [#allocation3], 256
    $region21: #{tpu_custom_call.1} parent=1 // pred_fallthru
      _
    // Predicated region
    $region22: #{tpu_custom_call.1} parent=1 // pred_check
      _
    $region23: #{tpu_custom_call.1} parent=1 // pred_check_branch
      %68 = sbr.rel (0) target = $region25
    $region24: #{tpu_custom_call.1} parent=1 // pred_region
      %69 = dma.done [#allocation6], 256
    $region25: #{tpu_custom_call.1} parent=1 // pred_fallthru
      _
    // Predicated region
    $region26: #{tpu_custom_call.1} parent=1 // pred_check
      _
    $region27: #{tpu_custom_call.1} parent=1 // pred_check_branch
      %71 = sbr.rel (0) target = $region29
    $region28: #{tpu_custom_call.1} parent=1 // pred_region
      %72 = dma.done [#allocation6], 256
    $region29: #{tpu_custom_call.1} parent=1 // pred_fallthru
      _
    // Predicated region
    $region30: #{tpu_custom_call.1} parent=1 // pred_check
      _
    $region31: #{tpu_custom_call.1} parent=1 // pred_check_branch
      %74 = sbr.rel (0) target = $region33
    $region32: #{tpu_custom_call.1} parent=1 // pred_region
      %75 = dma.done [#allocation9], 256
    $region33: #{tpu_custom_call.1} parent=1 // pred_fallthru
      _
    %v76 = vld [vmem:[#allocation5] sm:$0xff]
    %v77 = vld [vmem:[#allocation5 + $0x8] sm:$0xff]
    %v78 = vld [vmem:[#allocation7] sm:$0xff]
    %v79 = vld [vmem:[#allocation7 + $0x8] sm:$0xff]
    %v80 = vld [vmem:[#allocation8] sm:$0xff]
    %v81 = vld [vmem:[#allocation8 + $0x8] sm:$0xff]
    %v82 = vld [vmem:[#allocation2] sm:$0xff]
    %v83 = vld [vmem:[#allocation2 + $0x8] sm:$0xff]
    %85 = vset.pattern.permute.xlu0 0
    %86 = vperm.xlu0 %85, %v82
    %v87 = vpop.permute.xlu0 %86
    %90 = vset.pattern.permute.xlu0 0
    %91 = vperm.xlu0 %90, %v83
    %v92 = vpop.permute.xlu0 %91
    %v94 = vmul.f32 %v87, %v76
    %v95 = vmul.f32 %v92, %v77
    %v96 = vadd.f32 %v94, %v78
    %v97 = vadd.f32 %v95, %v79
    %98 = vrot.lane.b32.xlu0 %v82, 127
    %v99 = vpop.permute.xlu0 %98
    %100 = vrot.lane.b32.xlu0 %v83, 127
    %v101 = vpop.permute.xlu0 %100
    %v104 = vadd.f32 %v82, %v99
    %v105 = vadd.f32 %v83, %v101
    %106 = vset.pattern.permute.xlu0 1
    %107 = vperm.xlu0 %106, %v82
    %v108 = vpop.permute.xlu0 %107
    %110 = vset.pattern.permute.xlu0 1
    %111 = vperm.xlu0 %110, %v83
    %v112 = vpop.permute.xlu0 %111
    %v114 = vmul.f32 %v108, %v76
    %v115 = vmul.f32 %v112, %v77
    %v116 = vadd.f32 %v114, %v78
    %v117 = vadd.f32 %v115, %v79
    %v118 = vmul.f32 %v96, %v116
    %v119 = vmul.f32 %v97, %v117
    %120 = vrot.lane.b32.xlu0 %v82, 126
    %v121 = vpop.permute.xlu0 %120
    %122 = vrot.lane.b32.xlu0 %v83, 126
    %v123 = vpop.permute.xlu0 %122
    %v126 = vadd.f32 %v104, %v121
    %v127 = vadd.f32 %v105, %v123
    %128 = vset.pattern.permute.xlu0 2
    %129 = vperm.xlu0 %128, %v82
    %v130 = vpop.permute.xlu0 %129
    %132 = vset.pattern.permute.xlu0 2
    %133 = vperm.xlu0 %132, %v83
    %v134 = vpop.permute.xlu0 %133
    %v136 = vmul.f32 %v130, %v76
    %v137 = vmul.f32 %v134, %v77
    %v138 = vadd.f32 %v136, %v78
    %v139 = vadd.f32 %v137, %v79
    %v140 = vmul.f32 %v118, %v138
    %v141 = vmul.f32 %v119, %v139
    %142 = vrot.lane.b32.xlu0 %v82, 125
    %v143 = vpop.permute.xlu0 %142
    %144 = vrot.lane.b32.xlu0 %v83, 125
    %v145 = vpop.permute.xlu0 %144
    %v148 = vadd.f32 %v126, %v143
    %v149 = vadd.f32 %v127, %v145
    %150 = vset.pattern.permute.xlu0 3
    %151 = vperm.xlu0 %150, %v82
    %v152 = vpop.permute.xlu0 %151
    %154 = vset.pattern.permute.xlu0 3
    %155 = vperm.xlu0 %154, %v83
    %v156 = vpop.permute.xlu0 %155
    %v158 = vmul.f32 %v152, %v76
    %v159 = vmul.f32 %v156, %v77
    %v160 = vadd.f32 %v158, %v78
    %v161 = vadd.f32 %v159, %v79
    %v162 = vmul.f32 %v140, %v160
    %v163 = vmul.f32 %v141, %v161
    %v164 = vlog2.pop %v162
    %v165 = vmul.f32 %v164, 0.6931472
    %v166 = vlog2.pop %v163
    %v167 = vmul.f32 %v166, 0.6931472
    %168 = vrot.lane.b32.xlu0 %v82, 124
    %v169 = vpop.permute.xlu0 %168
    %170 = vrot.lane.b32.xlu0 %v83, 124
    %v171 = vpop.permute.xlu0 %170
    %v174 = vadd.f32 %v148, %v169
    %v175 = vadd.f32 %v149, %v171
    %176 = vset.pattern.permute.xlu0 4
    %177 = vperm.xlu0 %176, %v82
    %v178 = vpop.permute.xlu0 %177
    %180 = vset.pattern.permute.xlu0 4
    %181 = vperm.xlu0 %180, %v83
    %v182 = vpop.permute.xlu0 %181
    %v184 = vmul.f32 %v178, %v76
    %v185 = vmul.f32 %v182, %v77
    %v186 = vadd.f32 %v184, %v78
    %v187 = vadd.f32 %v185, %v79
    %188 = vrot.lane.b32.xlu0 %v82, 123
    %v189 = vpop.permute.xlu0 %188
    %190 = vrot.lane.b32.xlu0 %v83, 123
    %v191 = vpop.permute.xlu0 %190
    %v194 = vadd.f32 %v174, %v189
    %v195 = vadd.f32 %v175, %v191
    %196 = vset.pattern.permute.xlu0 5
    %197 = vperm.xlu0 %196, %v82
    %v198 = vpop.permute.xlu0 %197
    %200 = vset.pattern.permute.xlu0 5
    %201 = vperm.xlu0 %200, %v83
    %v202 = vpop.permute.xlu0 %201
    %v204 = vmul.f32 %v198, %v76
    %v205 = vmul.f32 %v202, %v77
    %v206 = vadd.f32 %v204, %v78
    %v207 = vadd.f32 %v205, %v79
    %v208 = vmul.f32 %v186, %v206
    %v209 = vmul.f32 %v187, %v207
    %210 = vrot.lane.b32.xlu0 %v82, 122
    %v211 = vpop.permute.xlu0 %210
    %212 = vrot.lane.b32.xlu0 %v83, 122
    %v213 = vpop.permute.xlu0 %212
    %v216 = vadd.f32 %v194, %v211
    %v217 = vadd.f32 %v195, %v213
    %218 = vset.pattern.permute.xlu0 6
    %219 = vperm.xlu0 %218, %v82
    %v220 = vpop.permute.xlu0 %219
    %222 = vset.pattern.permute.xlu0 6
    %223 = vperm.xlu0 %222, %v83
    %v224 = vpop.permute.xlu0 %223
    %v226 = vmul.f32 %v220, %v76
    %v227 = vmul.f32 %v224, %v77
    %v228 = vadd.f32 %v226, %v78
    %v229 = vadd.f32 %v227, %v79
    %v230 = vmul.f32 %v208, %v228
    %v231 = vmul.f32 %v209, %v229
    %232 = vrot.lane.b32.xlu0 %v82, 121
    %v233 = vpop.permute.xlu0 %232
    %234 = vrot.lane.b32.xlu0 %v83, 121
    %v235 = vpop.permute.xlu0 %234
    %v238 = vadd.f32 %v216, %v233
    %v239 = vadd.f32 %v217, %v235
    %240 = vset.pattern.permute.xlu0 7
    %241 = vperm.xlu0 %240, %v82
    %v242 = vpop.permute.xlu0 %241
    %244 = vset.pattern.permute.xlu0 7
    %245 = vperm.xlu0 %244, %v83
    %v246 = vpop.permute.xlu0 %245
    %v248 = vmul.f32 %v242, %v76
    %v249 = vmul.f32 %v246, %v77
    %v250 = vadd.f32 %v248, %v78
    %v251 = vadd.f32 %v249, %v79
    %v252 = vmul.f32 %v230, %v250
    %v253 = vmul.f32 %v231, %v251
    %v254 = vlog2.pop %v252
    %v255 = vmul.f32 %v254, 0.6931472
    %v256 = vlog2.pop %v253
    %v257 = vmul.f32 %v256, 0.6931472
    %v258 = vadd.f32 %v165, %v255
    %v259 = vadd.f32 %v167, %v257
    %260 = vrot.lane.b32.xlu0 %v82, 120
    %v261 = vpop.permute.xlu0 %260
    %262 = vrot.lane.b32.xlu0 %v83, 120
    %v263 = vpop.permute.xlu0 %262
    %v266 = vadd.f32 %v238, %v261
    %v267 = vadd.f32 %v239, %v263
    %268 = vset.pattern.permute.xlu0 8
    %269 = vperm.xlu0 %268, %v82
    %v270 = vpop.permute.xlu0 %269
    %272 = vset.pattern.permute.xlu0 8
    %273 = vperm.xlu0 %272, %v83
    %v274 = vpop.permute.xlu0 %273
    %v276 = vmul.f32 %v270, %v76
    %v277 = vmul.f32 %v274, %v77
    %v278 = vadd.f32 %v276, %v78
    %v279 = vadd.f32 %v277, %v79
    %280 = vrot.lane.b32.xlu0 %v82, 119
    %v281 = vpop.permute.xlu0 %280
    %282 = vrot.lane.b32.xlu0 %v83, 119
    %v283 = vpop.permute.xlu0 %282
    %v286 = vadd.f32 %v266, %v281
    %v287 = vadd.f32 %v267, %v283
    %288 = vset.pattern.permute.xlu0 9
    %289 = vperm.xlu0 %288, %v82
    %v290 = vpop.permute.xlu0 %289
    %292 = vset.pattern.permute.xlu0 9
    %293 = vperm.xlu0 %292, %v83
    %v294 = vpop.permute.xlu0 %293
    %v296 = vmul.f32 %v290, %v76
    %v297 = vmul.f32 %v294, %v77
    %v298 = vadd.f32 %v296, %v78
    %v299 = vadd.f32 %v297, %v79
    %v300 = vmul.f32 %v278, %v298
    %v301 = vmul.f32 %v279, %v299
    %302 = vrot.lane.b32.xlu0 %v82, 118
    %v303 = vpop.permute.xlu0 %302
    %304 = vrot.lane.b32.xlu0 %v83, 118
    %v305 = vpop.permute.xlu0 %304
    %v308 = vadd.f32 %v286, %v303
    %v309 = vadd.f32 %v287, %v305
    %310 = vset.pattern.permute.xlu0 10
    %311 = vperm.xlu0 %310, %v82
    %v312 = vpop.permute.xlu0 %311
    %314 = vset.pattern.permute.xlu0 10
    %315 = vperm.xlu0 %314, %v83
    %v316 = vpop.permute.xlu0 %315
    %v318 = vmul.f32 %v312, %v76
    %v319 = vmul.f32 %v316, %v77
    %v320 = vadd.f32 %v318, %v78
    %v321 = vadd.f32 %v319, %v79
    %v322 = vmul.f32 %v300, %v320
    %v323 = vmul.f32 %v301, %v321
    %324 = vrot.lane.b32.xlu0 %v82, 117
    %v325 = vpop.permute.xlu0 %324
    %326 = vrot.lane.b32.xlu0 %v83, 117
    %v327 = vpop.permute.xlu0 %326
    %v330 = vadd.f32 %v308, %v325
    %v331 = vadd.f32 %v309, %v327
    %332 = vset.pattern.permute.xlu0 11
    %333 = vperm.xlu0 %332, %v82
    %v334 = vpop.permute.xlu0 %333
    %336 = vset.pattern.permute.xlu0 11
    %337 = vperm.xlu0 %336, %v83
    %v338 = vpop.permute.xlu0 %337
    %v340 = vmul.f32 %v334, %v76
    %v341 = vmul.f32 %v338, %v77
    %v342 = vadd.f32 %v340, %v78
    %v343 = vadd.f32 %v341, %v79
    %v344 = vmul.f32 %v322, %v342
    %v345 = vmul.f32 %v323, %v343
    %v346 = vlog2.pop %v344
    %v347 = vmul.f32 %v346, 0.6931472
    %v348 = vlog2.pop %v345
    %v349 = vmul.f32 %v348, 0.6931472
    %v350 = vadd.f32 %v258, %v347
    %v351 = vadd.f32 %v259, %v349
    %352 = vrot.lane.b32.xlu0 %v82, 116
    %v353 = vpop.permute.xlu0 %352
    %354 = vrot.lane.b32.xlu0 %v83, 116
    %v355 = vpop.permute.xlu0 %354
    %v358 = vadd.f32 %v330, %v353
    %v359 = vadd.f32 %v331, %v355
    %360 = vset.pattern.permute.xlu0 12
    %361 = vperm.xlu0 %360, %v82
    %v362 = vpop.permute.xlu0 %361
    %364 = vset.pattern.permute.xlu0 12
    %365 = vperm.xlu0 %364, %v83
    %v366 = vpop.permute.xlu0 %365
    %v368 = vmul.f32 %v362, %v76
    %v369 = vmul.f32 %v366, %v77
    %v370 = vadd.f32 %v368, %v78
    %v371 = vadd.f32 %v369, %v79
    %372 = vrot.lane.b32.xlu0 %v82, 115
    %v373 = vpop.permute.xlu0 %372
    %374 = vrot.lane.b32.xlu0 %v83, 115
    %v375 = vpop.permute.xlu0 %374
    %v378 = vadd.f32 %v358, %v373
    %v379 = vadd.f32 %v359, %v375
    %380 = vset.pattern.permute.xlu0 13
    %381 = vperm.xlu0 %380, %v82
    %v382 = vpop.permute.xlu0 %381
    %384 = vset.pattern.permute.xlu0 13
    %385 = vperm.xlu0 %384, %v83
    %v386 = vpop.permute.xlu0 %385
    %v388 = vmul.f32 %v382, %v76
    %v389 = vmul.f32 %v386, %v77
    %v390 = vadd.f32 %v388, %v78
    %v391 = vadd.f32 %v389, %v79
    %v392 = vmul.f32 %v370, %v390
    %v393 = vmul.f32 %v371, %v391
    %394 = vrot.lane.b32.xlu0 %v82, 114
    %v395 = vpop.permute.xlu0 %394
    %396 = vrot.lane.b32.xlu0 %v83, 114
    %v397 = vpop.permute.xlu0 %396
    %v400 = vadd.f32 %v378, %v395
    %v401 = vadd.f32 %v379, %v397
    %402 = vset.pattern.permute.xlu0 14
    %403 = vperm.xlu0 %402, %v82
    %v404 = vpop.permute.xlu0 %403
    %406 = vset.pattern.permute.xlu0 14
    %407 = vperm.xlu0 %406, %v83
    %v408 = vpop.permute.xlu0 %407
    %v410 = vmul.f32 %v404, %v76
    %v411 = vmul.f32 %v408, %v77
    %v412 = vadd.f32 %v410, %v78
    %v413 = vadd.f32 %v411, %v79
    %v414 = vmul.f32 %v392, %v412
    %v415 = vmul.f32 %v393, %v413
    %416 = vrot.lane.b32.xlu0 %v82, 113
    %v417 = vpop.permute.xlu0 %416
    %418 = vrot.lane.b32.xlu0 %v83, 113
    %v419 = vpop.permute.xlu0 %418
    %v422 = vadd.f32 %v400, %v417
    %v423 = vadd.f32 %v401, %v419
    %424 = vset.pattern.permute.xlu0 15
    %425 = vperm.xlu0 %424, %v82
    %v426 = vpop.permute.xlu0 %425
    %428 = vset.pattern.permute.xlu0 15
    %429 = vperm.xlu0 %428, %v83
    %v430 = vpop.permute.xlu0 %429
    %v432 = vmul.f32 %v426, %v76
    %v433 = vmul.f32 %v430, %v77
    %v434 = vadd.f32 %v432, %v78
    %v435 = vadd.f32 %v433, %v79
    %v436 = vmul.f32 %v414, %v434
    %v437 = vmul.f32 %v415, %v435
    %v438 = vlog2.pop %v436
    %v439 = vmul.f32 %v438, 0.6931472
    %v440 = vlog2.pop %v437
    %v441 = vmul.f32 %v440, 0.6931472
    %v442 = vadd.f32 %v350, %v439
    %v443 = vadd.f32 %v351, %v441
    %vm444 = vcmp.eq.f32.partialorder %v80, 0.0
    %vm445 = vcmp.eq.f32.partialorder %v81, 0.0
    %v446 = vmul.f32 %v442, 0.0625
    %v447 = vmul.f32 %v443, 0.0625
    %v448 = vmul.f32 %v80, %v446
    %v449 = vmul.f32 %v81, %v447
    %v450 = vsel %vm444, 0.0, %v448
    %v451 = vsel %vm445, 0.0, %v449
    %v452 = vmul.f32 %v422, 0.0625
    %v453 = vmul.f32 %v423, 0.0625
    %455 = vset.pattern.permute.xlu0 0
    %456 = vperm.xlu0 %455, %v452
    %v457 = vpop.permute.xlu0 %456
    %460 = vset.pattern.permute.xlu0 0
    %461 = vperm.xlu0 %460, %v453
    %v462 = vpop.permute.xlu0 %461
    %v464 = vmul.f32 %v76, %v457
    %v465 = vmul.f32 %v77, %v462
    %v466 = vadd.f32 %v464, %v78
    %v467 = vadd.f32 %v465, %v79
    %v468 = vsub.f32 %v450, %v466
    %v469 = vsub.f32 %v451, %v467
    %v470 = vadd.f32 %v80, 1.0
    %v471 = vadd.f32 %v81, 1.0
    %v472 = vmax.f32 %v470, 3.0
    %v473 = vmax.f32 %v471, 3.0
    %v474 = vrcp.pop %v472
    %v475 = vmul.f32 1.0, %v474
    %v476 = vrcp.pop %v473
    %v477 = vmul.f32 1.0, %v476
    %v478 = vmul.f32 %v475, %v475
    %v479 = vmul.f32 %v477, %v477
    %v480 = vsub.f32 %v472, 0.5
    %v481 = vsub.f32 %v473, 0.5
    %v482 = vlog2.pop %v472
    %v483 = vmul.f32 %v482, 0.6931472
    %v484 = vlog2.pop %v473
    %v485 = vmul.f32 %v484, 0.6931472
    %v486 = vmul.f32 %v480, %v483
    %v487 = vmul.f32 %v481, %v485
    %v488 = vsub.f32 %v486, %v472
    %v489 = vsub.f32 %v487, %v473
    %v490 = vadd.f32 %v488, 0.9189385
    %v491 = vadd.f32 %v489, 0.9189385
    %v492 = vmul.f32 %v478, 0.0007936508
    %v493 = vmul.f32 %v479, 0.0007936508
    %v494 = vsub.f32 0.0027777778, %v492
    %v495 = vsub.f32 0.0027777778, %v493
    %v496 = vmul.f32 %v478, %v494
    %v497 = vmul.f32 %v479, %v495
    %v498 = vsub.f32 0.083333336, %v496
    %v499 = vsub.f32 0.083333336, %v497
    %v500 = vmul.f32 %v475, %v498
    %v501 = vmul.f32 %v477, %v499
    %v502 = vadd.f32 %v490, %v500
    %v503 = vadd.f32 %v491, %v501
    %vm504 = vcmp.lt.f32.partialorder %v80, 2.0
    %vm505 = vcmp.lt.f32.partialorder %v81, 2.0
    %v506 = vsel %vm504, 0.0, %v502
    %v507 = vsel %vm505, 0.0, %v503
    %v508 = vsub.f32 %v468, %v506
    %v509 = vsub.f32 %v469, %v507
    %510 = vst [vmem:[#allocation10] sm:$0xff] %v508
    %511 = vst [vmem:[#allocation10 + $0x8] sm:$0xff] %v509
    %v512 = vlog2.pop %v76
    %v513 = vmul.f32 %v512, 0.6931472
    %v514 = vlog2.pop %v77
    %v515 = vmul.f32 %v514, 0.6931472
    %v516 = vsub.f32 %v513, -1.609438
    %v517 = vsub.f32 %v515, -1.609438
    %v518 = vmul.f32 %v76, %v516
    %v519 = vmul.f32 %v77, %v517
    %v520 = vsub.f32 1.0, %v76
    %v521 = vsub.f32 1.0, %v77
    %v522 = vlog2.pop %v520
    %v523 = vmul.f32 %v522, 0.6931472
    %v524 = vlog2.pop %v521
    %v525 = vmul.f32 %v524, 0.6931472
    %v526 = vsub.f32 %v523, -0.22314355
    %v527 = vsub.f32 %v525, -0.22314355
    %v528 = vmul.f32 %v520, %v526
    %v529 = vmul.f32 %v521, %v527
    %v530 = vadd.f32 %v518, %v528
    %v531 = vadd.f32 %v519, %v529
    %v532 = vadd.f32 %v530, %v531
    %v533 = vrot.slane %v532, 4
    %v534 = vadd.f32 %v532, %v533
    %v535 = vrot.slane %v534, 2
    %v536 = vadd.f32 %v534, %v535
    %v537 = vrot.slane %v536, 1
    %v538 = vadd.f32 %v536, %v537
    %539 = vst [vmem:[#allocation11] sm:$0x1] %v538
    // Predicated region
    $region34: #{tpu_custom_call.1} parent=1 // pred_check
      _
    $region35: #{tpu_custom_call.1} parent=1 // pred_check_branch
      %541 = sbr.rel (0) target = $region37
    $region36: #{tpu_custom_call.1} parent=1 // pred_region
      %s543 = ssub.s32 256, 256
      %544 = vsyncadd [#allocation4], %s543
      %s545 = sshll.u32 [#allocation10], 4
      %s546 = int_to_ptr.vmem [resolvable:$true] %s545
      %551 = dma.vmem_to_hbm [thread:$0]  %s546, 256, %s4, [#allocation4], 128, 128, 8
    $region37: #{tpu_custom_call.1} parent=1 // pred_fallthru
      _
    // Predicated region
    $region38: #{tpu_custom_call.1} parent=1 // pred_check
      _
    $region39: #{tpu_custom_call.1} parent=1 // pred_check_branch
      %553 = sbr.rel (0) target = $region41
    $region40: #{tpu_custom_call.1} parent=1 // pred_region
      %s555 = ssub.s32 16, 16
      %556 = vsyncadd [#allocation12], %s555
      %s558 = sshll.u32 [#allocation11], 4
      %s559 = int_to_ptr.vmem [resolvable:$true] %s558
      %561 = dma.vmem_to_hbm [thread:$0]  %s559, 16, %s5, [#allocation12]
    $region41: #{tpu_custom_call.1} parent=1 // pred_fallthru
      _
    // Predicated region
    $region42: #{tpu_custom_call.1} parent=1 // pred_check
      _
    $region43: #{tpu_custom_call.1} parent=1 // pred_check_branch
      %563 = sbr.rel (0) target = $region45
    $region44: #{tpu_custom_call.1} parent=1 // pred_region
      %564 = dma.done [#allocation4], 256
    $region45: #{tpu_custom_call.1} parent=1 // pred_fallthru
      _
    // Predicated region
    $region46: #{tpu_custom_call.1} parent=1 // pred_check
      _
    $region47: #{tpu_custom_call.1} parent=1 // pred_check_branch
      %566 = sbr.rel (0) target = $region49
    $region48: #{tpu_custom_call.1} parent=1 // pred_region
      %567 = dma.done [#allocation12], 16
    $region49: #{tpu_custom_call.1} parent=1 // pred_fallthru
      _
    %568 = vsyncpa [#allocation3], 1
    %569 = vsyncpa [#allocation6], 1
    %570 = vsyncpa [#allocation9], 1
    %571 = vsyncpa [#allocation4], 1
    %572 = vsyncpa [#allocation12], 1

</llo_original>
